<compile_context>
chip_gen: v5e
topology: v5e:2x2
jax: 0.10.0
libtpu: 0.0.40
codegen_flags: <defaults>
</compile_context>

<pallas_src>
import functools

import jax
import jax.numpy as jnp
from jax.experimental import pallas as pl
from jax.experimental.pallas import tpu as pltpu


def _bce_sum_kernel(p_ref, t_ref, out_ref, acc_ref, *, total_rows, row_tile,
                    tiles_per_chunk, needs_mask):
    par = pl.program_id(0)        # parallel chunk id (megacore axis)
    t = pl.program_id(1)          # row-tile id within the chunk (reduction axis)

    @pl.when(t == 0)
    def _():
        acc_ref[...] = jnp.zeros_like(acc_ref)

    tile_idx = par * tiles_per_chunk + t
    row_start = tile_idx * row_tile

    def body(mask_tail):
        p = p_ref[...].astype(jnp.float32)
        tg = t_ref[...].astype(jnp.float32)
        # BCE with PyTorch's -100 clamp on each log term, factored as
        #   -(log1mp + t*(logp - log1mp))   -> two EUP logs, fewer VPU ops.
        log_p = jnp.maximum(jnp.log(p), -100.0)
        log_1mp = jnp.maximum(jnp.log(1.0 - p), -100.0)
        elem = -(log_1mp + tg * (log_p - log_1mp))
        if mask_tail:
            # Select (not multiply) so NaN/Inf from garbage data in the
            # partially-DMA'd last block cannot poison the sum.
            row = row_start + jax.lax.broadcasted_iota(jnp.int32, elem.shape, 0)
            elem = jnp.where(row < total_rows, elem, 0.0)
        acc_ref[...] += elem      # pure VPU accumulation; no per-tile XLU reduce

    if needs_mask:
        is_full = row_start + row_tile <= total_rows
        @pl.when(is_full)
        def _():
            body(False)           # interior tiles: unmasked fast path
        @pl.when(jnp.logical_not(is_full))
        def _():
            body(True)            # ragged last tile / phantom tiles only
    else:
        body(False)

    @pl.when(t == tiles_per_chunk - 1)
    def _():
        # Single cross-lane reduce per chunk; broadcast so the 128-lane output
        # slot is written with one unmasked, lane-dense store.
        out_ref[...] = jnp.full(out_ref.shape, jnp.sum(acc_ref[...]),
                                dtype=out_ref.dtype)


def _round_up(x, m):
    return -(-x // m) * m


def _pick_view(total, max_cols=8192):
    """Best zero-copy 2D factorization (rows, cols) of `total` elements.

    Maximizes vreg occupancy: rows pad to multiples of 8 (sublanes), cols to
    multiples of 128 (lanes).  Cols are capped so an 8-row slab stays small.
    """
    divisors = []
    d = 1
    while d * d <= total:
        if total % d == 0:
            divisors.append(d)
            divisors.append(total // d)
        d += 1
    best_rc, best_key = (total, 1), None
    for c in divisors:
        if c > max_cols:
            continue
        r = total // c
        padded = _round_up(r, 8) * _round_up(c, 128)
        # score: useful fraction of padded vreg space; tie-break: lane-multiple
        # columns, then more rows (finer tiling granularity).
        key = (total / padded, 1 if c % 128 == 0 else 0, r)
        if best_key is None or key > best_key:
            best_key, best_rc = key, (r, c)
    return best_rc


def bce_loss(output, target, *, block_bytes=2 * 1024 * 1024, num_parallel=8):
    """nn.BCELoss()(output.squeeze(1), target.float()), reduction='mean'."""
    if output.ndim == target.ndim + 1 and output.shape[1] == 1:
        probs = jnp.squeeze(output, axis=1)          # (N, H, W)
    else:
        probs = output
    if probs.shape != target.shape:
        raise ValueError(f"shape mismatch: {probs.shape} vs {target.shape}")

    tgt = target
    if tgt.dtype == jnp.bool_:
        tgt = tgt.astype(jnp.uint8)   # 1 byte/elem; f32 upcast happens in-kernel

    total = int(probs.size)
    if total >= 2 ** 31:
        raise ValueError("int32 row indexing supports < 2**31 elements")

    rows, cols = _pick_view(total)
    p2 = probs.reshape(rows, cols)    # zero-copy views; memory stays contiguous
    t2 = tgt.reshape(rows, cols)

    # Row tile: multiple of 16 (bf16 sublane packing), budgeted on f32 bytes so
    # the f32 accumulator also fits.  ~2 MiB keeps 2 inputs x 2 pipeline buffers
    # + accumulator ~10 MiB, under v5e's 16 MiB scoped-VMEM default.
    rows_per_block = max(8, (block_bytes // (cols * 4)) // 16 * 16)
    if rows <= rows_per_block:
        row_tile, num_tiles = rows, 1
    else:
        row_tile, num_tiles = rows_per_block, pl.cdiv(rows, rows_per_block)

    # Parallel chunks: prefer a divisor of num_tiles (zero phantom tiles);
    # otherwise fall back to 2 chunks (<=1 masked phantom) so v7x's two
    # TensorCores both get work.  v5e/v6e are single-TC: neutral there.
    npar = 1
    for cand in range(min(max(num_parallel, 1), num_tiles), 1, -1):
        if num_tiles % cand == 0:
            npar = cand
            break
    if npar == 1 and num_tiles >= 4:
        npar = 2
    tiles_per_chunk = pl.cdiv(num_tiles, npar)
    needs_mask = (rows % row_tile != 0) or (npar * tiles_per_chunk != num_tiles)

    last_tile = num_tiles - 1

    def in_map(par, t):
        # Clamp phantom (par, t) pairs onto the last real tile; the in-kernel
        # mask (based on the *intended* row range) zeroes their contribution.
        return (jnp.minimum(par * tiles_per_chunk + t, last_tile), 0)

    kernel = functools.partial(
        _bce_sum_kernel, total_rows=rows, row_tile=row_tile,
        tiles_per_chunk=tiles_per_chunk, needs_mask=needs_mask)

    # One 128-lane slot per parallel chunk; every lane of a slot holds that
    # chunk's partial sum (lane-dense, unmasked output stores).
    partial_sums = pl.pallas_call(
        kernel,
        out_shape=jax.ShapeDtypeStruct((1, npar * 128), jnp.float32),
        grid=(npar, tiles_per_chunk),
        in_specs=[pl.BlockSpec((row_tile, cols), in_map),
                  pl.BlockSpec((row_tile, cols), in_map)],
        out_specs=pl.BlockSpec((1, 128), lambda par, t: (0, par)),
        scratch_shapes=[pltpu.VMEM((row_tile, cols), jnp.float32)],
        # NOTE: plain "parallel" is the portable choice; on v7x,
        # pltpu.CORE_PARALLEL on this axis is the stronger guarantee that both
        # TensorCores are engaged.
        compiler_params=pltpu.CompilerParams(
            dimension_semantics=("parallel", "arbitrary")),
    )(p2, t2)

    partials = partial_sums.reshape(npar, 128)[:, 0]
    # nn.BCELoss default reduction='mean' over every element.
    return jnp.sum(partials) / jnp.float32(total)


if __name__ == "__main__":
    key = jax.random.PRNGKey(0)
    k1, k2, k3, k4, k5, k6 = jax.random.split(key, 6)

    def ref_bce(out, tgt):
        p = jnp.squeeze(out, 1).astype(jnp.float32)
        t = tgt.astype(jnp.float32)
        return jnp.mean(-(t * jnp.log(p) + (1.0 - t) * jnp.log(1.0 - p)))

    # --- case 1: module-consistent small shapes, f32 --------------------------
    out1 = jax.nn.sigmoid(jax.random.normal(k1, (2, 1, 16, 16), dtype=jnp.float32))
    tgt1 = jax.random.bernoulli(k2, 0.5, (2, 16, 16)).astype(jnp.float32)
    loss1 = bce_loss(out1, tgt1)
    jax.block_until_ready(loss1)
    ref1 = ref_bce(out1, tgt1)
    assert jnp.allclose(loss1, ref1, atol=1e-5, rtol=1e-5), (loss1, ref1)

    # --- case 2: forces row tiling, a ragged (masked) last tile, and the
    #     multi-chunk parallel partial-sum path ---------------------------------
    out2 = jax.nn.sigmoid(jax.random.normal(k3, (4, 1, 25, 25), dtype=jnp.float32))
    tgt2 = jax.random.bernoulli(k4, 0.3, (4, 25, 25)).astype(jnp.float32)
    loss2 = bce_loss(out2, tgt2, block_bytes=4096)
    jax.block_until_ready(loss2)
    ref2 = ref_bce(out2, tgt2)
    assert jnp.allclose(loss2, ref2, atol=1e-5, rtol=1e-5), (loss2, ref2)

    # --- case 3: bf16 probabilities + uint8 targets consumed natively ----------
    out3 = jax.nn.sigmoid(
        jax.random.normal(k5, (2, 1, 16, 24), dtype=jnp.float32)).astype(jnp.bfloat16)
    tgt3 = jax.random.bernoulli(k6, 0.5, (2, 16, 24)).astype(jnp.uint8)
    loss3 = bce_loss(out3, tgt3)
    jax.block_until_ready(loss3)
    ref3 = ref_bce(out3, tgt3)
    assert jnp.allclose(loss3, ref3, atol=1e-4, rtol=1e-4), (loss3, ref3)

    print("KERNEL_OK")
</pallas_src>

<mosaic_0001>
module attributes {stable_mosaic.version = 11 : i64} {
  func.func @_bce_sum_kernel(%arg0: i32, %arg1: i32, %arg2: memref<4x128xf32, #tpu.memory_space<vmem>>, %arg3: memref<4x128xf32, #tpu.memory_space<vmem>>, %arg4: memref<1x128xf32, #tpu.memory_space<vmem>>, %arg5: memref<4x128xf32, #tpu.memory_space<vmem>>) attributes {dimension_semantics = [#tpu.dimension_semantics<parallel>, #tpu.dimension_semantics<arbitrary>], iteration_bounds = array<i64: 1, 1>, scalar_prefetch = 0 : i64, scratch_operands = 1 : i64, tpu.core_type = #tpu.core_type<tc>, window_params = [{transform_indices = @transform_0, window_bounds = array<i64: 4, 128>}, {transform_indices = @transform_1, window_bounds = array<i64: 4, 128>}, {transform_indices = @transform_2, window_bounds = array<i64: 1, 128>}]} {
    %c0_i32 = arith.constant 0 : i32
    %0 = arith.cmpi eq, %arg1, %c0_i32 : i32
    %1 = arith.extui %0 : i1 to i32
    %c0_i32_0 = arith.constant 0 : i32
    %2 = arith.cmpi ne, %1, %c0_i32_0 : i32
    scf.if %2 {
      %cst_13 = arith.constant 0.000000e+00 : f32
      %24 = vector.broadcast %cst_13 : f32 to vector<4x128xf32>
      %c0_14 = arith.constant 0 : index
      %c0_15 = arith.constant 0 : index
      %25 = vector.load %arg5[%c0_14, %c0_15] : memref<4x128xf32, #tpu.memory_space<vmem>>, vector<4x128xf32>
      tpu.vector_store %arg5[%c0_14, %c0_15], %24 {strides = array<i32>} : memref<4x128xf32, #tpu.memory_space<vmem>>, vector<4x128xf32>,
    } else {
    }
    %c0 = arith.constant 0 : index
    %c0_1 = arith.constant 0 : index
    %3 = vector.load %arg2[%c0, %c0_1] : memref<4x128xf32, #tpu.memory_space<vmem>>, vector<4x128xf32>
    %c0_2 = arith.constant 0 : index
    %c0_3 = arith.constant 0 : index
    %4 = vector.load %arg3[%c0_2, %c0_3] : memref<4x128xf32, #tpu.memory_space<vmem>>, vector<4x128xf32>
    %5 = math.log %3 : vector<4x128xf32>
    %cst = arith.constant -1.000000e+02 : f32
    %6 = vector.broadcast %cst : f32 to vector<4x128xf32>
    %7 = arith.maximumf %5, %6 : vector<4x128xf32>
    %cst_4 = arith.constant 1.000000e+00 : f32
    %8 = vector.broadcast %cst_4 : f32 to vector<4x128xf32>
    %9 = arith.subf %8, %3 : vector<4x128xf32>
    %10 = math.log %9 : vector<4x128xf32>
    %cst_5 = arith.constant -1.000000e+02 : f32
    %11 = vector.broadcast %cst_5 : f32 to vector<4x128xf32>
    %12 = arith.maximumf %10, %11 : vector<4x128xf32>
    %13 = arith.subf %7, %12 : vector<4x128xf32>
    %14 = arith.mulf %4, %13 : vector<4x128xf32>
    %15 = arith.addf %12, %14 : vector<4x128xf32>
    %cst_6 = arith.constant 0.000000e+00 : f32
    %16 = vector.broadcast %cst_6 : f32 to vector<4x128xf32>
    %17 = arith.subf %16, %15 : vector<4x128xf32>
    %c0_7 = arith.constant 0 : index
    %c0_8 = arith.constant 0 : index
    %18 = vector.load %arg5[%c0_7, %c0_8] : memref<4x128xf32, #tpu.memory_space<vmem>>, vector<4x128xf32>
    %19 = arith.addf %18, %17 : vector<4x128xf32>
    %c0_9 = arith.constant 0 : index
    %c0_10 = arith.constant 0 : index
    %20 = vector.load %arg5[%c0_9, %c0_10] : memref<4x128xf32, #tpu.memory_space<vmem>>, vector<4x128xf32>
    tpu.vector_store %arg5[%c0_9, %c0_10], %19 {strides = array<i32>} : memref<4x128xf32, #tpu.memory_space<vmem>>, vector<4x128xf32>,
    %c0_i32_11 = arith.constant 0 : i32
    %21 = arith.cmpi eq, %arg1, %c0_i32_11 : i32
    %22 = arith.extui %21 : i1 to i32
    %c0_i32_12 = arith.constant 0 : i32
    %23 = arith.cmpi ne, %22, %c0_i32_12 : i32
    scf.if %23 {
      %c0_13 = arith.constant 0 : index
      %c0_14 = arith.constant 0 : index
      %24 = vector.load %arg5[%c0_13, %c0_14] : memref<4x128xf32, #tpu.memory_space<vmem>>, vector<4x128xf32>
      %25 = vector.shape_cast %24 : vector<4x128xf32> to vector<1x4x128xf32>
      %cst_15 = arith.constant dense<0.000000e+00> : vector<1xf32>
      %26 = vector.multi_reduction <add>, %25, %cst_15 [1, 2] : vector<1x4x128xf32> to vector<1xf32>
      %27 = vector.shape_cast %26 : vector<1xf32> to vector<1x1x1xf32>
      %28 = vector.extract %27[0, 0, 0] : f32 from vector<1x1x1xf32>
      %29 = vector.broadcast %28 : f32 to vector<1x128xf32>
      %c0_16 = arith.constant 0 : index
      %c0_17 = arith.constant 0 : index
      %30 = vector.load %arg4[%c0_16, %c0_17] : memref<1x128xf32, #tpu.memory_space<vmem>>, vector<1x128xf32>
      tpu.vector_store %arg4[%c0_16, %c0_17], %29 {strides = array<i32>} : memref<1x128xf32, #tpu.memory_space<vmem>>, vector<1x128xf32>,
    } else {
    }
    return
  }
  func.func @transform_0(%arg0: i32, %arg1: i32) -> (i32, i32) {
    %c1_i32 = arith.constant 1 : i32
    %0 = arith.muli %arg0, %c1_i32 : i32
    %1 = arith.addi %0, %arg1 : i32
    %c0_i32 = arith.constant 0 : i32
    %2 = arith.minsi %1, %c0_i32 : i32
    %c0_i32_0 = arith.constant 0 : i32
    %c0_i32_1 = arith.constant 0 : i32
    return %2, %c0_i32_0 : i32, i32
  }
  func.func @transform_1(%arg0: i32, %arg1: i32) -> (i32, i32) {
    %c1_i32 = arith.constant 1 : i32
    %0 = arith.muli %arg0, %c1_i32 : i32
    %1 = arith.addi %0, %arg1 : i32
    %c0_i32 = arith.constant 0 : i32
    %2 = arith.minsi %1, %c0_i32 : i32
    %c0_i32_0 = arith.constant 0 : i32
    %c0_i32_1 = arith.constant 0 : i32
    return %2, %c0_i32_0 : i32, i32
  }
  func.func @transform_2(%arg0: i32, %arg1: i32) -> (i32, i32) {
    %c0_i32 = arith.constant 0 : i32
    %c0_i32_0 = arith.constant 0 : i32
    return %c0_i32, %arg0 : i32, i32
  }
}

</mosaic_0001>

<llo_original>
// kernel: tpu_custom_call.1
$region0: #{tpu_custom_call.1}
  #allocation0 [shape = 'u32[]', space=smem, size = 0x4, offset = 0x4, fixed_abs, tag = 'smem constant byte address 0x4 - core index']
  #allocation1 [shape = 'u32[72,128]{1,0:T(1,128)}', space=vmem, size = 0x9000, scoped, tag = 'internal scratch']
  #allocation2 [shape = 'f32[4,128]{1,0:T(4,128)}', space=vmem, size = 0x800, scoped, tag = 'scratch operand']
  %s0 = inlined_call_operand.hbm [shape: f32[4,128], index: 0, kind: input, shape index: {}]
  %s1 = inlined_call_operand.hbm [shape: f32[4,128], index: 1, kind: input, shape index: {}]
  %s2 = inlined_call_operand.hbm [shape: f32[1,128], index: 2, kind: output, shape index: {}]
  %s3 = sld [smem:[#allocation0]]
  $region34: #{tpu_custom_call.1} parent=0
    _
  %s5 = ssub.s32 1, %s3
  %s6 = scalar_select 0, %s5, %s3
  $region1: #{tpu_custom_call.1} parent=0
    #allocation3 [shape = 'u8[2048]{0}', space=vmem, size = 0x800, scoped, tag = 'input window, operand 0, single buffered']
    #allocation4 [shape = 's32[1]{0}', space=sflag, size = 0x4, scoped, tag = 'scoped memory for tpu_custom_call.1']
    #allocation5 [shape = 's32[1]{0}', space=sflag, size = 0x4, scoped, tag = 'scoped memory for tpu_custom_call.1']
    #allocation6 [shape = 'u8[2048]{0}', space=vmem, size = 0x800, scoped, tag = 'input window, operand 1, single buffered']
    #allocation7 [shape = 's32[1]{0}', space=sflag, size = 0x4, scoped, tag = 'scoped memory for tpu_custom_call.1']
    #allocation8 [shape = 'u8[512]{0}', space=vmem, size = 0x400, scoped, tag = 'output window, operand 0, single buffered']
    %7 = vsyncpa [#allocation4], 0
    %8 = vsyncpa [#allocation7], 0
    %9 = vsyncpa [#allocation5], 0
    // Predicated region
    $region2: #{tpu_custom_call.1} parent=1 // pred_check
      _
    $region3: #{tpu_custom_call.1} parent=1 // pred_check_branch
      %11 = sbr.rel (0) target = $region5
    $region4: #{tpu_custom_call.1} parent=1 // pred_region
      %s12 = sadd.s32 0, 0
      %p13 = scmp.lt.s32.totalorder %s12, 0
      %s14 = scalar_select %p13, %s12, 0
      %16 = vsyncadd [#allocation4], 0
      %s17 = smul.addr %s14, 4
      %s18 = scalar_lea.hbm %s0, %s17
      %s20 = sshll.u32 %s18, 4
      %s21 = int_to_ptr.hbm [resolvable:$true] %s20
      %s22 = sshll.u32 [#allocation3], 4
      %s23 = int_to_ptr.vmem [resolvable:$true] %s22
      %25 = dma.hbm_to_vmem [thread:$0]  %s21, 64, %s23, [#allocation4]
    $region5: #{tpu_custom_call.1} parent=1 // pred_fallthru
      _
    // Predicated region
    $region6: #{tpu_custom_call.1} parent=1 // pred_check
      _
    $region7: #{tpu_custom_call.1} parent=1 // pred_check_branch
      %27 = sbr.rel (0) target = $region9
    $region8: #{tpu_custom_call.1} parent=1 // pred_region
      %s28 = sadd.s32 0, 0
      %p29 = scmp.lt.s32.totalorder %s28, 0
      %s30 = scalar_select %p29, %s28, 0
      %32 = vsyncadd [#allocation7], 0
      %s33 = smul.addr %s30, 4
      %s34 = scalar_lea.hbm %s1, %s33
      %s36 = sshll.u32 %s34, 4
      %s37 = int_to_ptr.hbm [resolvable:$true] %s36
      %s38 = sshll.u32 [#allocation6], 4
      %s39 = int_to_ptr.vmem [resolvable:$true] %s38
      %41 = dma.hbm_to_vmem [thread:$0]  %s37, 64, %s39, [#allocation7]
    $region9: #{tpu_custom_call.1} parent=1 // pred_fallthru
      _
    // Predicated region
    $region10: #{tpu_custom_call.1} parent=1 // pred_check
      _
    $region11: #{tpu_custom_call.1} parent=1 // pred_check_branch
      %43 = sbr.rel (0) target = $region13
    $region12: #{tpu_custom_call.1} parent=1 // pred_region
      %45 = dma.done [#allocation4], 64
    $region13: #{tpu_custom_call.1} parent=1 // pred_fallthru
      _
    // Predicated region
    $region14: #{tpu_custom_call.1} parent=1 // pred_check
      _
    $region15: #{tpu_custom_call.1} parent=1 // pred_check_branch
      %47 = sbr.rel (0) target = $region17
    $region16: #{tpu_custom_call.1} parent=1 // pred_region
      %49 = dma.done [#allocation7], 64
    $region17: #{tpu_custom_call.1} parent=1 // pred_fallthru
      _
    %s50 = sadd.s32 0, 0
    %p51 = scmp.lt.s32.totalorder %s50, 0
    %s52 = scalar_select %p51, %s50, 0
    %s53 = sadd.s32 0, 0
    %p54 = scmp.lt.s32.totalorder %s53, 0
    %s55 = scalar_select %p54, %s53, 0
    %p56 = scmp.eq.s32.totalorder 0, 0
    // Predicated region
    $region18: #{tpu_custom_call.1} parent=1 // pred_check
      %p57 = pneg %p56
    $region19: #{tpu_custom_call.1} parent=1 // pred_check_branch
      %59 = sbr.rel (%p57) target = $region21
    $region20: #{tpu_custom_call.1} parent=1 // pred_region
      %60 = vst [vmem:[#allocation2] sm:$0xf] 0.0
    $region21: #{tpu_custom_call.1} parent=1 // pred_fallthru
      _
    %v61 = vld [vmem:[#allocation3] sm:$0xf]
    %v62 = vld [vmem:[#allocation6] sm:$0xf]
    %v63 = vlog2.pop %v61
    %v64 = vmul.f32 %v63, 0.6931472
    %v65 = vmax.f32 %v64, -100.0
    %v66 = vsub.f32 1.0, %v61
    %v67 = vlog2.pop %v66
    %v68 = vmul.f32 %v67, 0.6931472
    %v69 = vmax.f32 %v68, -100.0
    %v70 = vsub.f32 %v65, %v69
    %v71 = vmul.f32 %v62, %v70
    %v72 = vadd.f32 %v69, %v71
    %v73 = vsub.f32 0.0, %v72
    %v74 = vld [vmem:[#allocation2] sm:$0xf]
    %v75 = vadd.f32 %v74, %v73
    %76 = vst [vmem:[#allocation2] sm:$0xf] %v75
    // Predicated region
    $region22: #{tpu_custom_call.1} parent=1 // pred_check
      %p77 = pneg %p56
    $region23: #{tpu_custom_call.1} parent=1 // pred_check_branch
      %79 = sbr.rel (%p77) target = $region25
    $region24: #{tpu_custom_call.1} parent=1 // pred_region
      %v80 = vld [vmem:[#allocation2] sm:$0xf]
      %vm81 = vcmask 1043456
      %v82 = vsel %vm81, %v80, 0.0
      %83 = vadd.xlane.f32.xlu0 %v82
      %v84 = vpop.xlane.xlu0 %83
      %v85 = vrot.slane %v84, 4
      %v86 = vadd.f32 %v84, %v85
      %v87 = vrot.slane %v86, 2
      %v88 = vadd.f32 %v86, %v87
      %v89 = vrot.slane %v88, 1
      %v90 = vadd.f32 %v88, %v89
      %s91 = vtos %v90
      %v92 = vstv %s91
      %93 = vst [vmem:[#allocation8] sm:$0x1] %v92
    $region25: #{tpu_custom_call.1} parent=1 // pred_fallthru
      _
    // Predicated region
    $region26: #{tpu_custom_call.1} parent=1 // pred_check
      _
    $region27: #{tpu_custom_call.1} parent=1 // pred_check_branch
      %95 = sbr.rel (0) target = $region29
    $region28: #{tpu_custom_call.1} parent=1 // pred_region
      %97 = vsyncadd [#allocation5], 0
      %s99 = sshll.u32 [#allocation8], 4
      %s100 = int_to_ptr.vmem [resolvable:$true] %s99
      %s101 = sshll.u32 %s2, 4
      %s102 = int_to_ptr.hbm [resolvable:$true] %s101
      %104 = dma.vmem_to_hbm [thread:$0]  %s100, 16, %s102, [#allocation5]
    $region29: #{tpu_custom_call.1} parent=1 // pred_fallthru
      _
    // Predicated region
    $region30: #{tpu_custom_call.1} parent=1 // pred_check
      _
    $region31: #{tpu_custom_call.1} parent=1 // pred_check_branch
      %106 = sbr.rel (0) target = $region33
    $region32: #{tpu_custom_call.1} parent=1 // pred_region
      %108 = dma.done [#allocation5], 16
    $region33: #{tpu_custom_call.1} parent=1 // pred_fallthru
      _
    %109 = vsyncpa [#allocation4], 1
    %110 = vsyncpa [#allocation7], 1
    %111 = vsyncpa [#allocation5], 1

</llo_original>
